<compile_context>
chip_gen: v7x
topology: tpu7x:2x2x1
jax: 0.10.0
libtpu: 0.0.40
codegen_flags: <defaults>
</compile_context>

<pallas_src>
import functools

import jax
import jax.numpy as jnp
from jax import lax
from jax.experimental import pallas as pl
from jax.experimental.pallas import tpu as pltpu


def _round_up(x, m):
    return ((x + m - 1) // m) * m


def _vmem_budget():
    """Returns (tile_budget_bytes, vmem_limit_bytes, hard_cap_bytes) for this chip."""
    try:
        info = pltpu.get_tpu_info()
        cap = int(getattr(info, "vmem_capacity_bytes", 0) or 0)
    except Exception:
        cap = 0
    if cap >= (100 << 20):            # v5e / v6e: 128 MiB physical VMEM
        return 32 << 20, 64 << 20, 100 << 20
    if cap > 0:                       # v7x: 64 MiB physical per TC -> stay conservative
        return 20 << 20, 32 << 20, 48 << 20
    return 16 << 20, 32 << 20, 64 << 20   # unknown backend -> conservative defaults


def _per_pixel_bytes(num_classes, logit_bytes, target_bytes):
    # double-buffered inputs: 2*(C*logit_bytes + target_bytes)
    # live f32 (C, TP) temporaries in the kernel (x, x-m, exp/select): ~3*C*4
    # (1, TP) f32 temporaries (max, sums, loss): ~24
    return 2 * (num_classes * logit_bytes + target_bytes) + 3 * num_classes * 4 + 24


def _pick_pixel_tile(num_classes, hw, logit_bytes, target_bytes, budget):
    per_pixel = _per_pixel_bytes(num_classes, logit_bytes, target_bytes)
    tp = budget // per_pixel
    tp = min(tp, 128 * 1024, _round_up(hw, 128))
    tp = max(128, (tp // 128) * 128)
    return int(tp)


def _ce_kernel(t_ref, x_ref, out_ref, acc_ref, *,
               label_smoothing, num_classes, num_pixels,
               tile_p, tiles_per_split, need_mask):
    s = pl.program_id(1)
    k = pl.program_id(2)

    @pl.when(k == 0)
    def _():
        acc_ref[...] = jnp.zeros_like(acc_ref)

    x = x_ref[0].astype(jnp.float32)      # (C, TP) logits for this pixel tile
    t = t_ref[0].astype(jnp.int32)        # (1, TP) class ids (widened in-register)

    # numerically stable log-sum-exp over the class (sublane) axis
    m = jnp.max(x, axis=0, keepdims=True)                     # (1, TP)
    xm = x - m                                                 # (C, TP)
    sum_exp = jnp.sum(jnp.exp(xm), axis=0, keepdims=True)      # (1, TP)

    # fused target-gather + uniform label smoothing; the max term m cancels:
    #   loss = lse - sum_c q_c x_c
    #        = log(sum_c exp(x-m)) - (eps/C)*sum_c(x-m) - (1-eps)*(x_t - m)
    eps = label_smoothing
    uni = eps / num_classes
    cls = lax.broadcasted_iota(jnp.int32, (num_classes, tile_p), 0)
    xm_t = jnp.sum(jnp.where(cls == t, xm, 0.0), axis=0, keepdims=True)   # (1, TP)
    sum_xm = jnp.sum(xm, axis=0, keepdims=True)                           # (1, TP)

    loss_pix = jnp.log(sum_exp) - uni * sum_xm - (1.0 - eps) * xm_t       # (1, TP)

    if need_mask:
        # mask lanes past the end of the image (tail tile / duplicated split tiles)
        lane = lax.broadcasted_iota(jnp.int32, (1, tile_p), 1)
        pix = (s * tiles_per_split + k) * tile_p + lane
        loss_pix = jnp.where(pix < num_pixels, loss_pix, 0.0)

    acc_ref[...] += jnp.sum(loss_pix, axis=1, keepdims=True)              # (1, 1)

    @pl.when(k == pl.num_programs(2) - 1)
    def _():
        out_ref[...] = (acc_ref[...] * (1.0 / num_pixels)).reshape(1, 1, 1, 1)


def cross_entropy_mean_hw(output, target, label_smoothing=0.1, pixel_tile=None):
    """output: (N, C, H, W) float logits (f32/bf16/f16); target: (N, H, W) int class ids.
    Returns (N,) float32: mean over (H, W) of per-pixel cross entropy with label
    smoothing (PyTorch CrossEntropyLoss(reduction='none') semantics + mean over (1,2))."""
    # TODO(synk): PyTorch's default ignore_index=-100 is not handled; targets are
    # assumed to be valid class ids in [0, C).
    # TODO(synk): very large C (class tile not fitting VMEM even at TP=128) would
    # need a class-tiled online LSE; we only raise the VMEM limit for that case.
    N, C, H, W = output.shape
    HW = H * W
    x = output.reshape(N, C, HW)                     # keep native dtype (no HBM upcast)

    # keep targets in their (narrow) integer dtype to save HBM traffic; widen in-kernel
    if jnp.issubdtype(target.dtype, jnp.integer) and jnp.dtype(target.dtype).itemsize <= 4:
        t = target.reshape(N, 1, HW)
    else:
        t = target.reshape(N, 1, HW).astype(jnp.int32)

    logit_bytes = jnp.dtype(x.dtype).itemsize
    target_bytes = jnp.dtype(t.dtype).itemsize
    budget, vmem_limit, vmem_cap = _vmem_budget()

    if pixel_tile is None:
        TP = _pick_pixel_tile(C, HW, logit_bytes, target_bytes, budget)
    else:
        assert pixel_tile % 128 == 0
        TP = int(pixel_tile)
    per_pixel = _per_pixel_bytes(C, logit_bytes, target_bytes)

    # if an oversized-C case needs more than the chip default, raise the limit
    est = per_pixel * TP * 3 // 2 + (2 << 20)
    if est > vmem_limit:
        vmem_limit = min(est, vmem_cap)

    n_k = pl.cdiv(HW, TP)

    # split the pixel-reduction axis across a second parallel grid axis when the
    # batch alone cannot feed both TensorCores (v7x megacore); partial means are
    # summed in JAX afterwards.
    S = 2 if (N == 1 and n_k >= 2) else 1
    kps = pl.cdiv(n_k, S)                 # pixel tiles per split
    total_tiles = S * kps
    need_mask = (total_tiles * TP != HW)

    kernel = functools.partial(
        _ce_kernel,
        label_smoothing=float(label_smoothing),
        num_classes=C,
        num_pixels=HW,
        tile_p=TP,
        tiles_per_split=kps,
        need_mask=need_mask,
    )

    if S == 1:
        def blk_map(n, s, k):
            return (n, 0, k)
    else:
        def blk_map(n, s, k):
            # clamp so the duplicated trailing tiles of the last split stay in bounds
            return (n, 0, jnp.minimum(s * kps + k, n_k - 1))

    cost = pl.CostEstimate(
        flops=8 * N * C * HW,
        transcendentals=N * (C + 1) * HW,
        bytes_accessed=N * C * HW * logit_bytes + N * HW * target_bytes + N * S * 4,
    )

    out = pl.pallas_call(
        kernel,
        out_shape=jax.ShapeDtypeStruct((N, S, 1, 1), jnp.float32),
        grid_spec=pltpu.PrefetchScalarGridSpec(
            num_scalar_prefetch=0,
            grid=(N, S, kps),
            in_specs=[
                pl.BlockSpec((1, 1, TP), blk_map),   # targets
                pl.BlockSpec((1, C, TP), blk_map),   # logits
            ],
            out_specs=pl.BlockSpec((1, 1, 1, 1), lambda n, s, k: (n, s, 0, 0)),
            scratch_shapes=[pltpu.VMEM((1, 1), jnp.float32)],
        ),
        compiler_params=pltpu.CompilerParams(
            dimension_semantics=("parallel", "parallel", "arbitrary"),
            vmem_limit_bytes=int(vmem_limit),
        ),
        cost_estimate=cost,
    )(t, x)
    return out.reshape(N, S).sum(axis=1)


def _reference(output, target, label_smoothing):
    # Pure-JAX reference of CrossEntropyLoss(reduction='none', label_smoothing) + mean(1,2)
    N, C, H, W = output.shape
    logp = jax.nn.log_softmax(output.astype(jnp.float32), axis=1)      # (N, C, H, W)
    onehot = jax.nn.one_hot(target, C, axis=1, dtype=logp.dtype)       # (N, C, H, W)
    q = (1.0 - label_smoothing) * onehot + label_smoothing / C
    ce = -jnp.sum(q * logp, axis=1)                                    # (N, H, W)
    return jnp.mean(ce, axis=(1, 2))                                   # (N,)


if __name__ == "__main__":
    key = jax.random.PRNGKey(0)
    k1, k2, k3, k4, k5, k6 = jax.random.split(key, 6)
    label_smoothing = 0.1

    # Test 1: f32 logits, single pixel tile.
    N, C, H, W = 2, 4, 16, 16
    logits = jax.random.normal(k1, (N, C, H, W), dtype=jnp.float32)
    target = jax.random.randint(k2, (N, H, W), 0, C, dtype=jnp.int32)
    loss = jax.block_until_ready(cross_entropy_mean_hw(logits, target, label_smoothing))
    ref = _reference(logits, target, label_smoothing)
    assert loss.shape == (N,)
    assert jnp.allclose(loss, ref, atol=1e-5, rtol=1e-5), (loss, ref)

    # Test 2: same inputs, forced 128-pixel tile -> exercises the k-axis accumulation.
    loss2 = jax.block_until_ready(
        cross_entropy_mean_hw(logits, target, label_smoothing, pixel_tile=128))
    assert jnp.allclose(loss2, ref, atol=1e-5, rtol=1e-5), (loss2, ref)

    # Test 3: bf16 logits + int16 targets, HW not a multiple of 128 -> narrow-dtype
    # passthrough + tail masking.
    N2, C2, H2, W2 = 2, 3, 10, 12
    logits_bf16 = jax.random.normal(k3, (N2, C2, H2, W2), dtype=jnp.float32).astype(jnp.bfloat16)
    target2 = jax.random.randint(k4, (N2, H2, W2), 0, C2, dtype=jnp.int32).astype(jnp.int16)
    loss3 = jax.block_until_ready(
        cross_entropy_mean_hw(logits_bf16, target2, label_smoothing))
    ref3 = _reference(logits_bf16, target2, label_smoothing)
    assert jnp.allclose(loss3, ref3, atol=1e-4, rtol=1e-4), (loss3, ref3)

    # Test 4: N == 1 with a forced small tile -> 2-way split of the pixel axis
    # (megacore path), clamped index_map and fully-masked duplicate tile.
    N3, C3, H3, W3 = 1, 5, 16, 20
    logits3 = jax.random.normal(k5, (N3, C3, H3, W3), dtype=jnp.float32)
    target3 = jax.random.randint(k6, (N3, H3, W3), 0, C3, dtype=jnp.int32)
    loss4 = jax.block_until_ready(
        cross_entropy_mean_hw(logits3, target3, label_smoothing, pixel_tile=128))
    ref4 = _reference(logits3, target3, label_smoothing)
    assert jnp.allclose(loss4, ref4, atol=1e-5, rtol=1e-5), (loss4, ref4)

    # Test 5: N == 1 with the default (single) tile -> no split, tail mask only.
    loss5 = jax.block_until_ready(
        cross_entropy_mean_hw(logits3, target3, label_smoothing))
    assert jnp.allclose(loss5, ref4, atol=1e-5, rtol=1e-5), (loss5, ref4)

    print("KERNEL_OK")
</pallas_src>

<mosaic_0001>
module attributes {stable_mosaic.version = 11 : i64} {
  func.func @_ce_kernel(%arg0: i32, %arg1: i32, %arg2: i32, %arg3: memref<1x1x256xi32, #tpu.memory_space<vmem>>, %arg4: memref<1x4x256xf32, #tpu.memory_space<vmem>>, %arg5: memref<1x1x1x1xf32, #tpu.memory_space<vmem>>, %arg6: memref<1x1xf32, #tpu.memory_space<vmem>>) attributes {dimension_semantics = [#tpu.dimension_semantics<parallel>, #tpu.dimension_semantics<parallel>, #tpu.dimension_semantics<arbitrary>], iteration_bounds = array<i64: 2, 1, 1>, scalar_prefetch = 0 : i64, scratch_operands = 1 : i64, tpu.core_type = #tpu.core_type<tc>, window_params = [{transform_indices = @transform_0, window_bounds = array<i64: 1, 1, 256>}, {transform_indices = @transform_1, window_bounds = array<i64: 1, 4, 256>}, {transform_indices = @transform_2, window_bounds = array<i64: 1, 1, 1, 1>}]} {
    %c0_i32 = arith.constant 0 : i32
    %0 = arith.cmpi eq, %arg2, %c0_i32 : i32
    %1 = arith.extui %0 : i1 to i32
    %c0_i32_0 = arith.constant 0 : i32
    %2 = arith.cmpi ne, %1, %c0_i32_0 : i32
    scf.if %2 {
      %cst_19 = arith.constant 0.000000e+00 : f32
      %38 = vector.broadcast %cst_19 : f32 to vector<1x1xf32>
      %c0_20 = arith.constant 0 : index
      %c0_21 = arith.constant 0 : index
      %39 = vector.load %arg6[%c0_20, %c0_21] : memref<1x1xf32, #tpu.memory_space<vmem>>, vector<1x1xf32>
      tpu.vector_store %arg6[%c0_20, %c0_21], %38 {strides = array<i32>} : memref<1x1xf32, #tpu.memory_space<vmem>>, vector<1x1xf32>,
    } else {
    }
    %c0 = arith.constant 0 : index
    %c0_1 = arith.constant 0 : index
    %c0_2 = arith.constant 0 : index
    %3 = vector.load %arg4[%c0, %c0_1, %c0_2] : memref<1x4x256xf32, #tpu.memory_space<vmem>>, vector<1x4x256xf32>
    %4 = vector.shape_cast %3 : vector<1x4x256xf32> to vector<4x256xf32>
    %c0_3 = arith.constant 0 : index
    %c0_4 = arith.constant 0 : index
    %c0_5 = arith.constant 0 : index
    %5 = vector.load %arg3[%c0_3, %c0_4, %c0_5] : memref<1x1x256xi32, #tpu.memory_space<vmem>>, vector<1x1x256xi32>
    %6 = vector.shape_cast %5 : vector<1x1x256xi32> to vector<1x256xi32>
    %cst = arith.constant dense<0xFF800000> : vector<256xf32>
    %7 = vector.multi_reduction <maximumf>, %4, %cst [0] : vector<4x256xf32> to vector<256xf32>
    %8 = vector.shape_cast %7 : vector<256xf32> to vector<1x256xf32>
    %9 = vector.broadcast %8 : vector<1x256xf32> to vector<4x256xf32>
    %10 = arith.subf %4, %9 : vector<4x256xf32>
    %11 = math.exp %10 : vector<4x256xf32>
    %cst_6 = arith.constant dense<0.000000e+00> : vector<256xf32>
    %12 = vector.multi_reduction <add>, %11, %cst_6 [0] : vector<4x256xf32> to vector<256xf32>
    %13 = vector.shape_cast %12 : vector<256xf32> to vector<1x256xf32>
    %14 = tpu.iota {dimensions = array<i32: 0>} : vector<4x256xi32>
    %15 = vector.broadcast %6 : vector<1x256xi32> to vector<4x256xi32>
    %16 = arith.cmpi eq, %14, %15 : vector<4x256xi32>
    %cst_7 = arith.constant 0.000000e+00 : f32
    %17 = vector.broadcast %cst_7 : f32 to vector<4x256xf32>
    %18 = arith.select %16, %10, %17 : vector<4x256xi1>, vector<4x256xf32>
    %cst_8 = arith.constant dense<0.000000e+00> : vector<256xf32>
    %19 = vector.multi_reduction <add>, %18, %cst_8 [0] : vector<4x256xf32> to vector<256xf32>
    %20 = vector.shape_cast %19 : vector<256xf32> to vector<1x256xf32>
    %cst_9 = arith.constant dense<0.000000e+00> : vector<256xf32>
    %21 = vector.multi_reduction <add>, %10, %cst_9 [0] : vector<4x256xf32> to vector<256xf32>
    %22 = vector.shape_cast %21 : vector<256xf32> to vector<1x256xf32>
    %23 = math.log %13 : vector<1x256xf32>
    %cst_10 = arith.constant 2.500000e-02 : f32
    %24 = vector.broadcast %cst_10 : f32 to vector<1x256xf32>
    %25 = arith.mulf %24, %22 : vector<1x256xf32>
    %26 = arith.subf %23, %25 : vector<1x256xf32>
    %cst_11 = arith.constant 0.899999976 : f32
    %27 = vector.broadcast %cst_11 : f32 to vector<1x256xf32>
    %28 = arith.mulf %27, %20 : vector<1x256xf32>
    %29 = arith.subf %26, %28 : vector<1x256xf32>
    %c0_12 = arith.constant 0 : index
    %c0_13 = arith.constant 0 : index
    %30 = vector.load %arg6[%c0_12, %c0_13] : memref<1x1xf32, #tpu.memory_space<vmem>>, vector<1x1xf32>
    %cst_14 = arith.constant dense<0.000000e+00> : vector<1xf32>
    %31 = vector.multi_reduction <add>, %29, %cst_14 [1] : vector<1x256xf32> to vector<1xf32>
    %32 = vector.shape_cast %31 : vector<1xf32> to vector<1x1xf32>
    %33 = arith.addf %30, %32 : vector<1x1xf32>
    %c0_15 = arith.constant 0 : index
    %c0_16 = arith.constant 0 : index
    %34 = vector.load %arg6[%c0_15, %c0_16] : memref<1x1xf32, #tpu.memory_space<vmem>>, vector<1x1xf32>
    tpu.vector_store %arg6[%c0_15, %c0_16], %33 {strides = array<i32>} : memref<1x1xf32, #tpu.memory_space<vmem>>, vector<1x1xf32>,
    %c0_i32_17 = arith.constant 0 : i32
    %35 = arith.cmpi eq, %arg2, %c0_i32_17 : i32
    %36 = arith.extui %35 : i1 to i32
    %c0_i32_18 = arith.constant 0 : i32
    %37 = arith.cmpi ne, %36, %c0_i32_18 : i32
    scf.if %37 {
      %c0_19 = arith.constant 0 : index
      %c0_20 = arith.constant 0 : index
      %38 = vector.load %arg6[%c0_19, %c0_20] : memref<1x1xf32, #tpu.memory_space<vmem>>, vector<1x1xf32>
      %cst_21 = arith.constant 3.906250e-03 : f32
      %39 = vector.broadcast %cst_21 : f32 to vector<1x1xf32>
      %40 = arith.mulf %38, %39 : vector<1x1xf32>
      %41 = vector.shape_cast %40 : vector<1x1xf32> to vector<1x1x1x1xf32>
      %c0_22 = arith.constant 0 : index
      %c0_23 = arith.constant 0 : index
      %c0_24 = arith.constant 0 : index
      %c0_25 = arith.constant 0 : index
      %42 = vector.load %arg5[%c0_22, %c0_23, %c0_24, %c0_25] : memref<1x1x1x1xf32, #tpu.memory_space<vmem>>, vector<1x1x1x1xf32>
      tpu.vector_store %arg5[%c0_22, %c0_23, %c0_24, %c0_25], %41 {strides = array<i32>} : memref<1x1x1x1xf32, #tpu.memory_space<vmem>>, vector<1x1x1x1xf32>,
    } else {
    }
    return
  }
  func.func @transform_0(%arg0: i32, %arg1: i32, %arg2: i32) -> (i32, i32, i32) {
    %c0_i32 = arith.constant 0 : i32
    %c0_i32_0 = arith.constant 0 : i32
    return %arg0, %c0_i32, %arg2 : i32, i32, i32
  }
  func.func @transform_1(%arg0: i32, %arg1: i32, %arg2: i32) -> (i32, i32, i32) {
    %c0_i32 = arith.constant 0 : i32
    %c0_i32_0 = arith.constant 0 : i32
    return %arg0, %c0_i32, %arg2 : i32, i32, i32
  }
  func.func @transform_2(%arg0: i32, %arg1: i32, %arg2: i32) -> (i32, i32, i32, i32) {
    %c0_i32 = arith.constant 0 : i32
    %c0_i32_0 = arith.constant 0 : i32
    %c0_i32_1 = arith.constant 0 : i32
    return %arg0, %arg1, %c0_i32, %c0_i32_0 : i32, i32, i32, i32
  }
}

</mosaic_0001>

<llo_original>
// kernel: tpu_custom_call.1
$region0: #{tpu_custom_call.1}
  #allocation0 [shape = 'u32[]', space=smem, size = 0x4, offset = 0x4, fixed_abs, tag = 'smem constant byte address 0x4 - core index']
  #allocation1 [shape = 'u32[144,128]{1,0:T(1,128)}', space=vmem, size = 0x12000, scoped, tag = 'internal scratch']
  #allocation2 [shape = 'f32[1,1]{1,0:T(1,128)}', space=vmem, size = 0x200, scoped, tag = 'scratch operand']
  %s0 = inlined_call_operand.hbm [shape: s32[2,1,256], index: 0, kind: input, shape index: {}]
  %s1 = inlined_call_operand.hbm [shape: f32[2,4,256], index: 1, kind: input, shape index: {}]
  %s2 = inlined_call_operand.vmem [shape: f32[2,1,1,1], index: 2, kind: output, shape index: {}]
  %s3 = sld [smem:[#allocation0]]
  $region57: #{tpu_custom_call.1} parent=0
    _
  %s5 = ssub.s32 1, %s3
  %s6 = scalar_select 0, %s5, %s3
  $region1: #{tpu_custom_call.1} parent=0
    #allocation3 [shape = 'u8[2048]{0}', space=vmem, size = 0x800, scoped, tag = 'input window, operand 0']
    #allocation4 [shape = 's32[2]{0}', space=sflag, size = 0x8, scoped, tag = 'scoped memory for tpu_custom_call.1']
    #allocation5 [shape = 'u8[8192]{0}', space=vmem, size = 0x2000, scoped, tag = 'input window, operand 1']
    #allocation6 [shape = 's32[2]{0}', space=sflag, size = 0x8, scoped, tag = 'scoped memory for tpu_custom_call.1']
    %7 = vsyncpa [#allocation4], 0
    %s8 = scalar_lea.sflag [#allocation4], 1
    %9 = vsyncpa %s8, 0
    %10 = vsyncpa [#allocation6], 0
    %s11 = scalar_lea.sflag [#allocation6], 1
    %12 = vsyncpa %s11, 0
    loop: start=0, step=1, limit=4
    $region2: #{tpu_custom_call.1} parent=1 // loop_pre_header
      _
    $region3: #{tpu_custom_call.1} parent=1 // loop_header
      %s14 = sphi 0, %s18
      %p15 = scmp.ge.s32.totalorder %s14, 4
      %s21 = sphi 0, %s40
      %s22 = sphi 0, %s36
      %s23 = sphi 0, %s32
      %s24 = sphi 0, %s21
      %s25 = sphi 0, %s22
      %s26 = sphi 0, %s23
      %s27 = sphi 0, %s24
      %s28 = sphi 0, %s25
      %s29 = sphi 0, %s26
      %s45 = sphi 0, %s47
      %s48 = sphi 0, %s45
      %s49 = sphi 0, %s48
      %s65 = sphi 0, %s49
      %s73 = sphi 0, %s75
      %s76 = sphi 0, %s73
      %s77 = sphi 0, %s76
      %s93 = sphi 0, %s77
      %s101 = sphi 0, %s103
      %s104 = sphi 0, %s101
      %s105 = sphi 0, %s104
      %s121 = sphi 0, %s105
    $region4: #{tpu_custom_call.1} parent=1 // loop_header_branch
      %17 = sbr.rel (%p15) target = $region8
    $region5: #{tpu_custom_call.1} parent=1 // loop_body
      %s19 = ssub.s32 %s14, 1
      %s20 = ssub.s32 %s14, 2
      %s30 = sadd.s32 1, %s23
      %p31 = scmp.ge.s32.totalorder %s30, 1
      %s32 = scalar_select %p31, 0, %s30
      %s33 = sadd.s32 1, %s22
      %s34 = scalar_select %p31, %s33, %s22
      %p35 = scmp.ge.s32.totalorder %s34, 1
      %s36 = scalar_select %p35, 0, %s34
      %s37 = sadd.s32 1, %s21
      %s38 = scalar_select %p35, %s37, %s21
      %p39 = scmp.ge.s32.totalorder %s38, 2
      %s40 = scalar_select %p39, 0, %s38
      %s41 = ssub.s32 %s21, %s40
      %s42 = ssub.s32 %s23, %s32
      %s43 = sor.u32 %s41, %s42
      %p44 = scmp.eq.s32.totalorder %s43, 0
      %s46 = sadd.s32 %s45, 1
      %s47 = scalar_select %p44, %s45, %s46
      %p50 = pneg %p44
      %p51 = scmp.eq.s32.totalorder %s14, 1
      %p52 = por %p50, %p51
      %p53 = scmp.ne.s32.totalorder %s45, %s48
      %p54 = scmp.eq.s32.totalorder %s14, 0
      %p55 = por %p53, %p54
      %p56 = scmp.ne.s32.totalorder %s45, %s48
      %p57 = scmp.eq.s32.totalorder %s19, 1
      %p58 = por %p56, %p57
      %p59 = scmp.ne.s32.totalorder %s48, %s49
      %p60 = scmp.eq.s32.totalorder %s19, 0
      %p61 = por %p59, %p60
      %p62 = scmp.ne.s32.totalorder %s48, %s49
      %p63 = scmp.eq.s32.totalorder %s20, 1
      %p64 = por %p62, %p63
      %p66 = scmp.ne.s32.totalorder %s49, %s65
      %p67 = scmp.eq.s32.totalorder %s20, 0
      %p68 = por %p66, %p67
      %s69 = ssub.s32 %s21, %s40
      %s70 = ssub.s32 %s23, %s32
      %s71 = sor.u32 %s69, %s70
      %p72 = scmp.eq.s32.totalorder %s71, 0
      %s74 = sadd.s32 %s73, 1
      %s75 = scalar_select %p72, %s73, %s74
      %p78 = pneg %p72
      %p79 = scmp.eq.s32.totalorder %s14, 1
      %p80 = por %p78, %p79
      %p81 = scmp.ne.s32.totalorder %s73, %s76
      %p82 = scmp.eq.s32.totalorder %s14, 0
      %p83 = por %p81, %p82
      %p84 = scmp.ne.s32.totalorder %s73, %s76
      %p85 = scmp.eq.s32.totalorder %s19, 1
      %p86 = por %p84, %p85
      %p87 = scmp.ne.s32.totalorder %s76, %s77
      %p88 = scmp.eq.s32.totalorder %s19, 0
      %p89 = por %p87, %p88
      %p90 = scmp.ne.s32.totalorder %s76, %s77
      %p91 = scmp.eq.s32.totalorder %s20, 1
      %p92 = por %p90, %p91
      %p94 = scmp.ne.s32.totalorder %s77, %s93
      %p95 = scmp.eq.s32.totalorder %s20, 0
      %p96 = por %p94, %p95
      %s97 = ssub.s32 %s21, %s40
      %s98 = ssub.s32 %s22, %s36
      %s99 = sor.u32 %s97, %s98
      %p100 = scmp.eq.s32.totalorder %s99, 0
      %s102 = sadd.s32 %s101, 1
      %s103 = scalar_select %p100, %s101, %s102
      %p106 = pneg %p100
      %p107 = scmp.eq.s32.totalorder %s14, 1
      %p108 = por %p106, %p107
      %p109 = scmp.ne.s32.totalorder %s101, %s104
      %p110 = scmp.eq.s32.totalorder %s14, 0
      %p111 = por %p109, %p110
      %p112 = scmp.ne.s32.totalorder %s101, %s104
      %p113 = scmp.eq.s32.totalorder %s19, 1
      %p114 = por %p112, %p113
      %p115 = scmp.ne.s32.totalorder %s104, %s105
      %p116 = scmp.eq.s32.totalorder %s19, 0
      %p117 = por %p115, %p116
      %p118 = scmp.ne.s32.totalorder %s104, %s105
      %p119 = scmp.eq.s32.totalorder %s20, 1
      %p120 = por %p118, %p119
      %p122 = scmp.ne.s32.totalorder %s105, %s121
      %p123 = scmp.eq.s32.totalorder %s20, 0
      %p124 = por %p122, %p123
      %p125 = scmp.le.s32.totalorder 1, %s14
      %p126 = scmp.lt.s32.totalorder %s14, 3
      %p127 = pnand %p125, %p126
      %p128 = pneg %p127
      // Predicated region
      $region9: #{tpu_custom_call.1} parent=5 // pred_check
        _
      $region10: #{tpu_custom_call.1} parent=5 // pred_check_branch
        %130 = sbr.rel (%p127) target = $region12
      $region11: #{tpu_custom_call.1} parent=5 // pred_region
        %s131 = ssub.s32 %s14, 1
      $region12: #{tpu_custom_call.1} parent=5 // pred_fallthru
        _
      %p132 = scmp.lt.s32.totalorder %s14, 2
      // Predicated region
      $region13: #{tpu_custom_call.1} parent=5 // pred_check
        %p133 = pneg %p132
      $region14: #{tpu_custom_call.1} parent=5 // pred_check_branch
        %135 = sbr.rel (%p133) target = $region16
      $region15: #{tpu_custom_call.1} parent=5 // pred_region
        // Predicated region
        $region17: #{tpu_custom_call.1} parent=15 // pred_check
          %p136 = pneg %p55
        $region18: #{tpu_custom_call.1} parent=15 // pred_check_branch
          %138 = sbr.rel (%p136) target = $region20
        $region19: #{tpu_custom_call.1} parent=15 // pred_region
          %s139 = sand.u32 %s45, 1
          %s140 = scalar_lea.sflag [#allocation4], %s139
          %s141 = sand.u32 %s45, 1
          %s142 = smul.addr %s141, 2
          %s143 = scalar_lea.vmem [#allocation3], %s142
          %s144 = smul.u32 2, %s23
          %s146 = ssub.s32 32, 32
          %147 = vsyncadd %s140, %s146
          %s148 = smul.addr %s21, 2
          %s149 = sadd.s32 %s144, %s148
          %s150 = smul.addr %s149, 16
          %s151 = scalar_lea.hbm %s0, %s150
          %s153 = sshll.u32 %s143, 4
          %s154 = int_to_ptr.vmem [resolvable:$true] %s153
          %156 = dma.hbm_to_vmem [thread:$0]  %s151, 32, %s154, %s140
        $region20: #{tpu_custom_call.1} parent=15 // pred_fallthru
          _
        // Predicated region
        $region21: #{tpu_custom_call.1} parent=15 // pred_check
          %p157 = pneg %p83
        $region22: #{tpu_custom_call.1} parent=15 // pred_check_branch
          %159 = sbr.rel (%p157) target = $region24
        $region23: #{tpu_custom_call.1} parent=15 // pred_region
          %s160 = sand.u32 %s73, 1
          %s161 = scalar_lea.sflag [#allocation6], %s160
          %s162 = sand.u32 %s73, 1
          %s163 = smul.addr %s162, 8
          %s164 = scalar_lea.vmem [#allocation5], %s163
          %s165 = smul.u32 2, %s23
          %s167 = ssub.s32 128, 128
          %168 = vsyncadd %s161, %s167
          %s169 = smul.addr %s21, 2
          %s170 = sadd.s32 %s165, %s169
          %s171 = smul.addr %s170, 64
          %s172 = scalar_lea.hbm %s1, %s171
          %s174 = sshll.u32 %s164, 4
          %s175 = int_to_ptr.vmem [resolvable:$true] %s174
          %177 = dma.hbm_to_vmem [thread:$0]  %s172, 128, %s175, %s161
        $region24: #{tpu_custom_call.1} parent=15 // pred_fallthru
          _
      $region16: #{tpu_custom_call.1} parent=5 // pred_fallthru
        _
      %p178 = scmp.le.s32.totalorder 1, %s14
      %p179 = scmp.lt.s32.totalorder %s14, 3
      %p180 = pnand %p178, %p179
      %p181 = pneg %p180
      // Predicated region
      $region25: #{tpu_custom_call.1} parent=5 // pred_check
        _
      $region26: #{tpu_custom_call.1} parent=5 // pred_check_branch
        %183 = sbr.rel (%p180) target = $region28
      $region27: #{tpu_custom_call.1} parent=5 // pred_region
        %s184 = ssub.s32 %s14, 1
        %s185 = sand.u32 %s48, 1
        %s186 = scalar_lea.sflag [#allocation4], %s185
        %s187 = sand.u32 %s48, 1
        %s188 = smul.addr %s187, 2
        %s189 = scalar_lea.vmem [#allocation3], %s188
        // Predicated region
        $region29: #{tpu_custom_call.1} parent=27 // pred_check
          %p190 = pneg %p61
        $region30: #{tpu_custom_call.1} parent=27 // pred_check_branch
          %192 = sbr.rel (%p190) target = $region32
        $region31: #{tpu_custom_call.1} parent=27 // pred_region
          %193 = dma.done %s186, 32
        $region32: #{tpu_custom_call.1} parent=27 // pred_fallthru
          _
        %s194 = sand.u32 %s76, 1
        %s195 = scalar_lea.sflag [#allocation6], %s194
        %s196 = sand.u32 %s76, 1
        %s197 = smul.addr %s196, 8
        %s198 = scalar_lea.vmem [#allocation5], %s197
        // Predicated region
        $region33: #{tpu_custom_call.1} parent=27 // pred_check
          %p199 = pneg %p89
        $region34: #{tpu_custom_call.1} parent=27 // pred_check_branch
          %201 = sbr.rel (%p199) target = $region36
        $region35: #{tpu_custom_call.1} parent=27 // pred_region
          %202 = dma.done %s195, 128
        $region36: #{tpu_custom_call.1} parent=27 // pred_fallthru
          _
        %s203 = sand.u32 %s48, 1
        %s204 = scalar_lea.sflag [#allocation4], %s203
        %s205 = sand.u32 %s48, 1
        %s206 = smul.addr %s205, 2
        %s207 = scalar_lea.vmem [#allocation3], %s206
        %p208 = pneg %p61
        %p209 = pneg %p58
        %s210 = sand.u32 %s76, 1
        %s211 = scalar_lea.sflag [#allocation6], %s210
        %s212 = sand.u32 %s76, 1
        %s213 = smul.addr %s212, 8
        %s214 = scalar_lea.vmem [#allocation5], %s213
        %p215 = pneg %p89
        %p216 = pneg %p86
        %p217 = pneg %p117
        %p218 = pneg %p114
        %p219 = scmp.lt.s32.totalorder %s24, 1
        %s220 = scalar_select %p219, %s24, 1
        %p221 = scmp.lt.s32.totalorder %s25, 0
        %s222 = scalar_select %p221, %s25, 0
        %s223 = sadd.s32 %s222, %s220
        %s224 = scalar_lea.vmem %s2, %s223
        %s225 = smul.u32 2, %s26
        %s226 = smul.u32 2, %s26
        %p227 = scmp.lt.s32.totalorder %s24, 1
        %s228 = scalar_select %p227, %s24, 1
        %p229 = scmp.lt.s32.totalorder %s25, 0
        %s230 = scalar_select %p229, %s25, 0
        %s231 = sadd.s32 %s230, %s228
        %s232 = scalar_lea.vmem %s2, %s231
        %p233 = scmp.eq.s32.totalorder %s26, 0
        // Predicated region
        $region37: #{tpu_custom_call.1} parent=27 // pred_check
          %p234 = pneg %p233
        $region38: #{tpu_custom_call.1} parent=27 // pred_check_branch
          %236 = sbr.rel (%p234) target = $region40
        $region39: #{tpu_custom_call.1} parent=27 // pred_region
          %vm237 = vcmask 0
          %238 = vst.msk [vmem:[#allocation2] sm:$0x1] %vm237, 0.0
        $region40: #{tpu_custom_call.1} parent=27 // pred_fallthru
          _
        %v239 = vld [vmem:[%s198] sm:$0xff]
        %v240 = vld [vmem:[%s189] sm:$0x3]
        %v242 = vcombine.high %v239, %v239
        %vm244 = vcmask 1043456
        %v245 = vsel %vm244, %v239, -inf
        %v246 = vrot.slane %v245, 4
        %v247 = vmax.f32 %v245, %v246
        %v248 = vrot.slane %v247, 2
        %v249 = vmax.f32 %v247, %v248
        %v250 = vrot.slane %v249, 1
        %v251 = vmax.f32 %v249, %v250
        %v252 = vsel %vm244, %v242, -inf
        %v253 = vrot.slane %v252, 4
        %v254 = vmax.f32 %v252, %v253
        %v255 = vrot.slane %v254, 2
        %v256 = vmax.f32 %v254, %v255
        %v257 = vrot.slane %v256, 1
        %v258 = vmax.f32 %v256, %v257
        %v261 = vcombine.low %v251, %v258
        %v263 = vsub.f32 %v239, %v261
        %v264 = vmul.f32 %v263, 1.442695
        %v265 = vpow.pop %v264
        %v267 = vcombine.high %v265, %v265
        %v269 = vsel %vm244, %v265, 0.0
        %v270 = vrot.slane %v269, 4
        %v271 = vadd.f32 %v269, %v270
        %v272 = vrot.slane %v271, 2
        %v273 = vadd.f32 %v271, %v272
        %v274 = vrot.slane %v273, 1
        %v275 = vadd.f32 %v273, %v274
        %v276 = vsel %vm244, %v267, 0.0
        %v277 = vrot.slane %v276, 4
        %v278 = vadd.f32 %v276, %v277
        %v279 = vrot.slane %v278, 2
        %v280 = vadd.f32 %v278, %v279
        %v281 = vrot.slane %v280, 1
        %v282 = vadd.f32 %v280, %v281
        %v283 = vlaneseq
        %v284 = vshrl.u32 %v283, 7
        %v285 = vlaneseq
        %v286 = vshrl.u32 %v285, 7
        %v287 = vsub.s32 0, %v286
        %v288 = vrot.slane %v240, %v287
        %v289 = vlaneseq
        %v290 = vshrl.u32 %v289, 7
        %v291 = vsub.s32 1, %v290
        %v292 = vrot.slane %v240, %v291
        %vm293 = vcmp.eq.s32.totalorder %v284, %v288
        %vm294 = vcmp.eq.s32.totalorder %v284, %v292
        %v296 = vcombine.high %v263, %v263
        %v298 = vsel %vm293, %v263, 0.0
        %v299 = vsel %vm294, %v296, 0.0
        %v300 = vsel %vm244, %v298, 0.0
        %v301 = vrot.slane %v300, 4
        %v302 = vadd.f32 %v300, %v301
        %v303 = vrot.slane %v302, 2
        %v304 = vadd.f32 %v302, %v303
        %v305 = vrot.slane %v304, 1
        %v306 = vadd.f32 %v304, %v305
        %v307 = vsel %vm244, %v299, 0.0
        %v308 = vrot.slane %v307, 4
        %v309 = vadd.f32 %v307, %v308
        %v310 = vrot.slane %v309, 2
        %v311 = vadd.f32 %v309, %v310
        %v312 = vrot.slane %v311, 1
        %v313 = vadd.f32 %v311, %v312
        %v314 = vsel %vm244, %v263, 0.0
        %v315 = vrot.slane %v314, 4
        %v316 = vadd.f32 %v314, %v315
        %v317 = vrot.slane %v316, 2
        %v318 = vadd.f32 %v316, %v317
        %v319 = vrot.slane %v318, 1
        %v320 = vadd.f32 %v318, %v319
        %v321 = vsel %vm244, %v296, 0.0
        %v322 = vrot.slane %v321, 4
        %v323 = vadd.f32 %v321, %v322
        %v324 = vrot.slane %v323, 2
        %v325 = vadd.f32 %v323, %v324
        %v326 = vrot.slane %v325, 1
        %v327 = vadd.f32 %v325, %v326
        %v328 = vlog2.pop %v275
        %v329 = vmul.f32 %v328, 0.6931472
        %v330 = vlog2.pop %v282
        %v331 = vmul.f32 %v330, 0.6931472
        %v332 = vmul.f32 %v320, 0.025
        %v333 = vmul.f32 %v327, 0.025
        %v334 = vsub.f32 %v329, %v332
        %v335 = vsub.f32 %v331, %v333
        %v336 = vmul.f32 %v306, 0.9
        %v337 = vmul.f32 %v313, 0.9
        %v338 = vsub.f32 %v334, %v336
        %v339 = vsub.f32 %v335, %v337
        %v340 = vld [vmem:[#allocation2] sm:$0x1]
        %v341 = vadd.f32 %v338, %v339
        %342 = vadd.xlane.f32.xlu0 %v341
        %v343 = vpop.xlane.xlu0 %342
        %v344 = vadd.f32 %v340, %v343
        %vm345 = vcmask 0
        %346 = vst.msk [vmem:[#allocation2] sm:$0x1] %vm345, %v344
        // Predicated region
        $region41: #{tpu_custom_call.1} parent=27 // pred_check
          %p347 = pneg %p233
        $region42: #{tpu_custom_call.1} parent=27 // pred_check_branch
          %349 = sbr.rel (%p347) target = $region44
        $region43: #{tpu_custom_call.1} parent=27 // pred_region
          %v350 = vld [vmem:[#allocation2] sm:$0x1]
          %v351 = vmul.f32 %v350, 0.00390625
          %352 = vst.msk [vmem:[%s232] sm:$0x1] %vm345, %v351
        $region44: #{tpu_custom_call.1} parent=27 // pred_fallthru
          _
        %p353 = scmp.lt.s32.totalorder %s24, 1
        %s354 = scalar_select %p353, %s24, 1
        %p355 = scmp.lt.s32.totalorder %s25, 0
        %s356 = scalar_select %p355, %s25, 0
        %s357 = sadd.s32 %s356, %s354
        %s358 = scalar_lea.vmem %s2, %s357
        // Predicated region
        $region45: #{tpu_custom_call.1} parent=27 // pred_check
          %p359 = pneg %p114
        $region46: #{tpu_custom_call.1} parent=27 // pred_check_branch
          %361 = sbr.rel (%p359) target = $region48
        $region47: #{tpu_custom_call.1} parent=27 // pred_region
          _
        $region48: #{tpu_custom_call.1} parent=27 // pred_fallthru
          _
      $region28: #{tpu_custom_call.1} parent=5 // pred_fallthru
        _
      %p362 = scmp.le.s32.totalorder 2, %s14
      // Predicated region
      $region49: #{tpu_custom_call.1} parent=5 // pred_check
        %p363 = pneg %p362
      $region50: #{tpu_custom_call.1} parent=5 // pred_check_branch
        %365 = sbr.rel (%p363) target = $region52
      $region51: #{tpu_custom_call.1} parent=5 // pred_region
        %s366 = ssub.s32 %s14, 2
        // Predicated region
        $region53: #{tpu_custom_call.1} parent=51 // pred_check
          %p367 = pneg %p120
        $region54: #{tpu_custom_call.1} parent=51 // pred_check_branch
          %369 = sbr.rel (%p367) target = $region56
        $region55: #{tpu_custom_call.1} parent=51 // pred_region
          %p370 = scmp.lt.s32.totalorder %s27, 1
          %s371 = scalar_select %p370, %s27, 1
          %p372 = scmp.lt.s32.totalorder %s28, 0
          %s373 = scalar_select %p372, %s28, 0
          %s374 = sadd.s32 %s373, %s371
          %s375 = scalar_lea.vmem %s2, %s374
        $region56: #{tpu_custom_call.1} parent=51 // pred_fallthru
          _
      $region52: #{tpu_custom_call.1} parent=5 // pred_fallthru
        _
    $region6: #{tpu_custom_call.1} parent=1 // loop_footer
      %s18 = sadd.s32 1, %s14
    $region7: #{tpu_custom_call.1} parent=1 // loop_footer_branch
      %13 = sbr.rel target = $region3
    $region8: #{tpu_custom_call.1} parent=1 // loop_exit
      _
    %376 = vsyncpa [#allocation4], 1
    %s377 = scalar_lea.sflag [#allocation4], 1
    %378 = vsyncpa %s377, 1
    %379 = vsyncpa [#allocation6], 1
    %s380 = scalar_lea.sflag [#allocation6], 1
    %381 = vsyncpa %s380, 1

</llo_original>
